<compile_context>
chip_gen: v7x
topology: tpu7x:2x2x1
jax: 0.10.0
libtpu: 0.0.40
codegen_flags: <defaults>
</compile_context>

<pallas_src>
import math
import functools

import jax
import jax.numpy as jnp
from jax import lax
from jax.experimental import pallas as pl
from jax.experimental.pallas import tpu as pltpu

_UNROLL = 8  # manual unroll of per-row loops; tq is always a multiple of 8


def _embed_gather_kernel(ids_ref, table_ref, out_ref, rows_ref, sem,
                         *, scale, tq, n_tiles):
    # ids_ref:   (T_pad,) int32, SMEM (scalar-prefetched, already clamped to [0, V))
    # table_ref: (V, D)  HBM (pl.ANY) -- never made VMEM resident
    # out_ref:   (tq, D) VMEM output tile (pipeline double-buffers the writeback)
    # rows_ref:  (2, tq, D) VMEM 2-slot cross-grid-step gather buffer
    # sem:       (2,) DMA semaphores, one per slot
    i = pl.program_id(0)
    slot = i % 2
    nxt = 1 - slot

    def issue_tile(tile_idx, s):
        base = tile_idx * tq
        dst = rows_ref.at[s]

        @pl.loop(0, tq // _UNROLL)
        def _chunk(c):
            r0 = c * _UNROLL
            for k in range(_UNROLL):          # manual 8x unroll of descriptor issue
                r = r0 + k
                tok = ids_ref[base + r]       # single clamp lives in the wrapper
                pltpu.make_async_copy(
                    table_ref.at[pl.ds(tok, 1)],   # (1, D) row in HBM
                    dst.at[pl.ds(r, 1)],           # (1, D) row in VMEM slot s
                    sem.at[s],
                ).start()

    # Prime: issue this tile's gather on the very first grid step only.
    @pl.when(i == 0)
    def _():
        issue_tile(i, slot)

    # Prefetch the NEXT tile's rows into the other slot BEFORE waiting on this
    # one, so its HBM gather latency overlaps this tile's scale + writeback.
    @pl.when(i + 1 < n_tiles)
    def _():
        issue_tile(i + 1, nxt)

    # One aggregate wait retires all tq rows (tq*D*elt bytes) of this slot at
    # once instead of tq scalar waits.  The descriptor is never started -- it is
    # only used for byte accounting; src/dst are same-shaped VMEM views and the
    # dst being this slot also orders the read below after the wait.
    pltpu.make_async_copy(rows_ref.at[nxt], rows_ref.at[slot], sem.at[slot]).wait()

    # Fused * sqrt(D) in f32 (no-op for f32 tables; needed for bf16 tables on v5e).
    out_ref[...] = (rows_ref[slot].astype(jnp.float32) * scale).astype(out_ref.dtype)


def _embed_vmem_kernel(ids_ref, table_ref, out_ref, *, scale, tq):
    # Small-vocab fast path: table_ref is a VMEM-resident (V, D) block; gather with
    # dynamic in-VMEM row reads -- no DMA descriptors on the critical path.
    base = pl.program_id(0) * tq

    @pl.loop(0, tq // _UNROLL)
    def _chunk(c):
        r0 = c * _UNROLL
        for k in range(_UNROLL):
            r = r0 + k
            tok = ids_ref[base + r]
            row = table_ref[pl.ds(tok, 1), :]
            out_ref[pl.ds(r, 1), :] = (row.astype(jnp.float32) * scale).astype(out_ref.dtype)


@functools.partial(jax.jit, static_argnames=("tq", "small_vocab_bytes"))
def embeddings_forward(ids, table, *, tq=512, small_vocab_bytes=2 * 1024 * 1024):
    """ids: (B, S) int; table: (V, D) -> (B, S, D) scaled by sqrt(D)."""
    B, S = ids.shape
    V, D = table.shape
    T = B * S
    elt = table.dtype.itemsize
    scale = math.sqrt(D)

    # Token tile: multiple of 8, no larger than the (8-rounded) token count, and
    # shrunk so the VMEM footprint (2-slot gather scratch + double-buffered
    # output = 4 tiles) fits a budget that works on v7x (64 MiB) and v5e/v6e.
    t_round8 = ((T + 7) // 8) * 8
    tq_eff = max(8, (min(tq, t_round8) // 8) * 8)
    budget = 24 * 1024 * 1024
    while 4 * tq_eff * D * elt > budget and tq_eff > 8:
        tq_eff = max(8, (tq_eff // 2) // 8 * 8)
    T_pad = ((T + tq_eff - 1) // tq_eff) * tq_eff
    n_tiles = T_pad // tq_eff

    # Single OOB guard: clamp once here (cheap XLA op) so the in-kernel
    # descriptor-issue loop carries no extra scalar work.
    ids_flat = jnp.clip(ids.reshape(T).astype(jnp.int32), 0, V - 1)
    if T_pad != T:
        ids_flat = jnp.pad(ids_flat, (0, T_pad - T))   # pad -> row 0, sliced off below

    vmem_limit = 32 * 1024 * 1024

    if V * D * elt <= small_vocab_bytes:
        # -------- small-vocab fast path: VMEM-resident table, no gather DMAs ----
        kernel = functools.partial(_embed_vmem_kernel, scale=scale, tq=tq_eff)
        out_flat = pl.pallas_call(
            kernel,
            out_shape=jax.ShapeDtypeStruct((T_pad, D), table.dtype),
            grid_spec=pltpu.PrefetchScalarGridSpec(
                num_scalar_prefetch=1,                              # ids -> SMEM
                grid=(n_tiles,),
                in_specs=[pl.BlockSpec((V, D), lambda i, ids: (0, 0))],  # resident
                out_specs=pl.BlockSpec((tq_eff, D), lambda i, ids: (i, 0)),
            ),
            compiler_params=pltpu.CompilerParams(
                dimension_semantics=("parallel",),
                vmem_limit_bytes=vmem_limit,
            ),
        )(ids_flat, table)
    else:
        # -------- large-vocab path: HBM table + double-buffered DMA row gather --
        kernel = functools.partial(_embed_gather_kernel,
                                   scale=scale, tq=tq_eff, n_tiles=n_tiles)
        out_flat = pl.pallas_call(
            kernel,
            out_shape=jax.ShapeDtypeStruct((T_pad, D), table.dtype),
            grid_spec=pltpu.PrefetchScalarGridSpec(
                num_scalar_prefetch=1,                              # ids -> SMEM
                grid=(n_tiles,),
                in_specs=[pl.BlockSpec(memory_space=pl.ANY)],       # table stays in HBM
                out_specs=pl.BlockSpec((tq_eff, D), lambda i, ids: (i, 0)),
                scratch_shapes=[
                    pltpu.VMEM((2, tq_eff, D), table.dtype),        # 2-slot gather buffer
                    pltpu.SemaphoreType.DMA((2,)),                  # one sem per slot
                ],
            ),
            compiler_params=pltpu.CompilerParams(
                # Must be "arbitrary": the cross-step prefetch (slot/semaphore
                # carry, priming at i==0) needs consecutive grid indices on one
                # core.  TODO(synk): explicit CORE_PARALLEL leading axis for v7x.
                dimension_semantics=("arbitrary",),
                vmem_limit_bytes=vmem_limit,
            ),
        )(ids_flat, table)

    return out_flat[:T].reshape(B, S, D)


if __name__ == "__main__":
    # Small config consistent with Embeddings(d_model, vocab_size).
    d_model = 32
    vocab_size = 64
    batch, seq = 2, 8

    key = jax.random.PRNGKey(0)
    k_tab, k_ids = jax.random.split(key)

    # nn.Embedding default init: weight ~ N(0, 1).
    table = jax.random.normal(k_tab, (vocab_size, d_model), dtype=jnp.float32)
    ids = jax.random.randint(k_ids, (batch, seq), 0, vocab_size, dtype=jnp.int32)

    ref = jnp.take(table, ids, axis=0) * math.sqrt(d_model)

    # Path 1: small-vocab fast path (VMEM-resident table).
    out_fast = jax.block_until_ready(embeddings_forward(ids, table))
    assert out_fast.shape == (batch, seq, d_model)
    assert jnp.allclose(out_fast, ref, atol=1e-5, rtol=1e-5), "fast path mismatch"

    # Path 2: force the HBM-gather path (production vocab path) on the same data.
    out_gather = jax.block_until_ready(
        embeddings_forward(ids, table, small_vocab_bytes=0))
    assert jnp.allclose(out_gather, ref, atol=1e-5, rtol=1e-5), "gather path mismatch"

    print("KERNEL_OK")
</pallas_src>

<mosaic_0001>
module attributes {stable_mosaic.version = 11 : i64} {
  func.func @_embed_vmem_kernel(%arg0: i32, %arg1: memref<16xi32, #tpu.memory_space<smem>>, %arg2: memref<64x32xf32, #tpu.memory_space<vmem>>, %arg3: memref<16x32xf32, #tpu.memory_space<vmem>>) attributes {dimension_semantics = [#tpu.dimension_semantics<parallel>], iteration_bounds = array<i64: 1>, scalar_prefetch = 1 : i64, scratch_operands = 0 : i64, tpu.core_type = #tpu.core_type<tc>, window_params = [{pipeline_mode = #tpu.pipeline_mode<synchronous>, transform_indices = @transform_0, window_bounds = array<i64: 64, 32>}, {transform_indices = @transform_1, window_bounds = array<i64: 16, 32>}]} {
    %c16_i32 = arith.constant 16 : i32
    %0 = arith.muli %arg0, %c16_i32 : i32
    %c0_i32 = arith.constant 0 : i32
    %c2_i32 = arith.constant 2 : i32
    %1 = arith.addi %c0_i32, %c2_i32 : i32
    %c1_i32 = arith.constant 1 : i32
    scf.for %arg4 = %c0_i32 to %1 step %c1_i32  : i32 {
      %c1_i32_1 = arith.constant 1 : i32
      %2 = arith.muli %arg4, %c1_i32_1 : i32
      %c0_i32_2 = arith.constant 0 : i32
      %3 = arith.addi %c0_i32_2, %2 : i32
      %c8_i32 = arith.constant 8 : i32
      %4 = arith.muli %3, %c8_i32 : i32
      %c0_i32_3 = arith.constant 0 : i32
      %5 = arith.addi %4, %c0_i32_3 : i32
      %6 = arith.addi %0, %5 : i32
      %7 = arith.index_cast %6 : i32 to index
      %8 = memref.load %arg1[%7] : memref<16xi32, #tpu.memory_space<smem>>
      %9 = arith.index_cast %8 : i32 to index
      %c0 = arith.constant 0 : index
      %10 = vector.load %arg2[%9, %c0] : memref<64x32xf32, #tpu.memory_space<vmem>>, vector<1x32xf32>
      %cst = arith.constant 5.65685415 : f32
      %11 = vector.broadcast %cst : f32 to vector<1x32xf32>
      %12 = arith.mulf %10, %11 : vector<1x32xf32>
      %13 = arith.index_cast %5 : i32 to index
      %c0_4 = arith.constant 0 : index
      %14 = vector.load %arg3[%13, %c0_4] : memref<16x32xf32, #tpu.memory_space<vmem>>, vector<1x32xf32>
      tpu.vector_store %arg3[%13, %c0_4], %12 {strides = array<i32>} : memref<16x32xf32, #tpu.memory_space<vmem>>, vector<1x32xf32>,
      %c1_i32_5 = arith.constant 1 : i32
      %15 = arith.addi %4, %c1_i32_5 : i32
      %16 = arith.addi %0, %15 : i32
      %17 = arith.index_cast %16 : i32 to index
      %18 = memref.load %arg1[%17] : memref<16xi32, #tpu.memory_space<smem>>
      %19 = arith.index_cast %18 : i32 to index
      %c0_6 = arith.constant 0 : index
      %20 = vector.load %arg2[%19, %c0_6] : memref<64x32xf32, #tpu.memory_space<vmem>>, vector<1x32xf32>
      %cst_7 = arith.constant 5.65685415 : f32
      %21 = vector.broadcast %cst_7 : f32 to vector<1x32xf32>
      %22 = arith.mulf %20, %21 : vector<1x32xf32>
      %23 = arith.index_cast %15 : i32 to index
      %c0_8 = arith.constant 0 : index
      %24 = vector.load %arg3[%23, %c0_8] : memref<16x32xf32, #tpu.memory_space<vmem>>, vector<1x32xf32>
      tpu.vector_store %arg3[%23, %c0_8], %22 {strides = array<i32>} : memref<16x32xf32, #tpu.memory_space<vmem>>, vector<1x32xf32>,
      %c2_i32_9 = arith.constant 2 : i32
      %25 = arith.addi %4, %c2_i32_9 : i32
      %26 = arith.addi %0, %25 : i32
      %27 = arith.index_cast %26 : i32 to index
      %28 = memref.load %arg1[%27] : memref<16xi32, #tpu.memory_space<smem>>
      %29 = arith.index_cast %28 : i32 to index
      %c0_10 = arith.constant 0 : index
      %30 = vector.load %arg2[%29, %c0_10] : memref<64x32xf32, #tpu.memory_space<vmem>>, vector<1x32xf32>
      %cst_11 = arith.constant 5.65685415 : f32
      %31 = vector.broadcast %cst_11 : f32 to vector<1x32xf32>
      %32 = arith.mulf %30, %31 : vector<1x32xf32>
      %33 = arith.index_cast %25 : i32 to index
      %c0_12 = arith.constant 0 : index
      %34 = vector.load %arg3[%33, %c0_12] : memref<16x32xf32, #tpu.memory_space<vmem>>, vector<1x32xf32>
      tpu.vector_store %arg3[%33, %c0_12], %32 {strides = array<i32>} : memref<16x32xf32, #tpu.memory_space<vmem>>, vector<1x32xf32>,
      %c3_i32 = arith.constant 3 : i32
      %35 = arith.addi %4, %c3_i32 : i32
      %36 = arith.addi %0, %35 : i32
      %37 = arith.index_cast %36 : i32 to index
      %38 = memref.load %arg1[%37] : memref<16xi32, #tpu.memory_space<smem>>
      %39 = arith.index_cast %38 : i32 to index
      %c0_13 = arith.constant 0 : index
      %40 = vector.load %arg2[%39, %c0_13] : memref<64x32xf32, #tpu.memory_space<vmem>>, vector<1x32xf32>
      %cst_14 = arith.constant 5.65685415 : f32
      %41 = vector.broadcast %cst_14 : f32 to vector<1x32xf32>
      %42 = arith.mulf %40, %41 : vector<1x32xf32>
      %43 = arith.index_cast %35 : i32 to index
      %c0_15 = arith.constant 0 : index
      %44 = vector.load %arg3[%43, %c0_15] : memref<16x32xf32, #tpu.memory_space<vmem>>, vector<1x32xf32>
      tpu.vector_store %arg3[%43, %c0_15], %42 {strides = array<i32>} : memref<16x32xf32, #tpu.memory_space<vmem>>, vector<1x32xf32>,
      %c4_i32 = arith.constant 4 : i32
      %45 = arith.addi %4, %c4_i32 : i32
      %46 = arith.addi %0, %45 : i32
      %47 = arith.index_cast %46 : i32 to index
      %48 = memref.load %arg1[%47] : memref<16xi32, #tpu.memory_space<smem>>
      %49 = arith.index_cast %48 : i32 to index
      %c0_16 = arith.constant 0 : index
      %50 = vector.load %arg2[%49, %c0_16] : memref<64x32xf32, #tpu.memory_space<vmem>>, vector<1x32xf32>
      %cst_17 = arith.constant 5.65685415 : f32
      %51 = vector.broadcast %cst_17 : f32 to vector<1x32xf32>
      %52 = arith.mulf %50, %51 : vector<1x32xf32>
      %53 = arith.index_cast %45 : i32 to index
      %c0_18 = arith.constant 0 : index
      %54 = vector.load %arg3[%53, %c0_18] : memref<16x32xf32, #tpu.memory_space<vmem>>, vector<1x32xf32>
      tpu.vector_store %arg3[%53, %c0_18], %52 {strides = array<i32>} : memref<16x32xf32, #tpu.memory_space<vmem>>, vector<1x32xf32>,
      %c5_i32 = arith.constant 5 : i32
      %55 = arith.addi %4, %c5_i32 : i32
      %56 = arith.addi %0, %55 : i32
      %57 = arith.index_cast %56 : i32 to index
      %58 = memref.load %arg1[%57] : memref<16xi32, #tpu.memory_space<smem>>
      %59 = arith.index_cast %58 : i32 to index
      %c0_19 = arith.constant 0 : index
      %60 = vector.load %arg2[%59, %c0_19] : memref<64x32xf32, #tpu.memory_space<vmem>>, vector<1x32xf32>
      %cst_20 = arith.constant 5.65685415 : f32
      %61 = vector.broadcast %cst_20 : f32 to vector<1x32xf32>
      %62 = arith.mulf %60, %61 : vector<1x32xf32>
      %63 = arith.index_cast %55 : i32 to index
      %c0_21 = arith.constant 0 : index
      %64 = vector.load %arg3[%63, %c0_21] : memref<16x32xf32, #tpu.memory_space<vmem>>, vector<1x32xf32>
      tpu.vector_store %arg3[%63, %c0_21], %62 {strides = array<i32>} : memref<16x32xf32, #tpu.memory_space<vmem>>, vector<1x32xf32>,
      %c6_i32 = arith.constant 6 : i32
      %65 = arith.addi %4, %c6_i32 : i32
      %66 = arith.addi %0, %65 : i32
      %67 = arith.index_cast %66 : i32 to index
      %68 = memref.load %arg1[%67] : memref<16xi32, #tpu.memory_space<smem>>
      %69 = arith.index_cast %68 : i32 to index
      %c0_22 = arith.constant 0 : index
      %70 = vector.load %arg2[%69, %c0_22] : memref<64x32xf32, #tpu.memory_space<vmem>>, vector<1x32xf32>
      %cst_23 = arith.constant 5.65685415 : f32
      %71 = vector.broadcast %cst_23 : f32 to vector<1x32xf32>
      %72 = arith.mulf %70, %71 : vector<1x32xf32>
      %73 = arith.index_cast %65 : i32 to index
      %c0_24 = arith.constant 0 : index
      %74 = vector.load %arg3[%73, %c0_24] : memref<16x32xf32, #tpu.memory_space<vmem>>, vector<1x32xf32>
      tpu.vector_store %arg3[%73, %c0_24], %72 {strides = array<i32>} : memref<16x32xf32, #tpu.memory_space<vmem>>, vector<1x32xf32>,
      %c7_i32 = arith.constant 7 : i32
      %75 = arith.addi %4, %c7_i32 : i32
      %76 = arith.addi %0, %75 : i32
      %77 = arith.index_cast %76 : i32 to index
      %78 = memref.load %arg1[%77] : memref<16xi32, #tpu.memory_space<smem>>
      %79 = arith.index_cast %78 : i32 to index
      %c0_25 = arith.constant 0 : index
      %80 = vector.load %arg2[%79, %c0_25] : memref<64x32xf32, #tpu.memory_space<vmem>>, vector<1x32xf32>
      %cst_26 = arith.constant 5.65685415 : f32
      %81 = vector.broadcast %cst_26 : f32 to vector<1x32xf32>
      %82 = arith.mulf %80, %81 : vector<1x32xf32>
      %83 = arith.index_cast %75 : i32 to index
      %c0_27 = arith.constant 0 : index
      %84 = vector.load %arg3[%83, %c0_27] : memref<16x32xf32, #tpu.memory_space<vmem>>, vector<1x32xf32>
      tpu.vector_store %arg3[%83, %c0_27], %82 {strides = array<i32>} : memref<16x32xf32, #tpu.memory_space<vmem>>, vector<1x32xf32>,
    }
    %c2_i32_0 = arith.constant 2 : i32
    return
  }
  func.func @transform_0(%arg0: i32, %arg1: memref<16xi32, #tpu.memory_space<smem>>) -> (i32, i32) {
    %c0_i32 = arith.constant 0 : i32
    %c0_i32_0 = arith.constant 0 : i32
    %c0_i32_1 = arith.constant 0 : i32
    return %c0_i32, %c0_i32_0 : i32, i32
  }
  func.func @transform_1(%arg0: i32, %arg1: memref<16xi32, #tpu.memory_space<smem>>) -> (i32, i32) {
    %c0_i32 = arith.constant 0 : i32
    %c0_i32_0 = arith.constant 0 : i32
    return %arg0, %c0_i32 : i32, i32
  }
}

</mosaic_0001>

<llo_original>
// kernel: embeddings_forward.1
$region0: #{embeddings_forward.1}
  #allocation0 [shape = 'u32[]', space=smem, size = 0x4, offset = 0x4, fixed_abs, tag = 'smem constant byte address 0x4 - core index']
  #allocation1 [shape = 'u32[144,128]{1,0:T(1,128)}', space=vmem, size = 0x12000, scoped, tag = 'internal scratch']
  #allocation2 [shape = 's32[1]{0}', space=sflag, size = 0x4, scoped, tag = 'scoped memory for embeddings_forward.1']
  #allocation3 [shape = 'u8[512]{0}', space=smem, size = 0x200, scoped, tag = 'prefetched SMEM operand 0']
  %s0 = inlined_call_operand.vmem [shape: s32[16], index: 0, kind: input, shape index: {}]
  %s1 = inlined_call_operand.vmem [shape: f32[64,32], index: 1, kind: input, shape index: {}]
  %s2 = inlined_call_operand.hbm [shape: f32[16,32], index: 2, kind: output, shape index: {}]
  %s3 = sld [smem:[#allocation0]]
  $region21: #{embeddings_forward.1} parent=0
    _
  %s5 = ssub.s32 1, %s3
  %s6 = scalar_select 0, %s5, %s3
  %s7 = sshll.u32 %s0, 4
  %s8 = int_to_ptr.vmem [resolvable:$true] %s7
  %10 = dma.vmem_to_smem %s8, 16, [#allocation3], [#allocation2]
  %11 = dma.done [#allocation2], 16
  %12 = sfence
  $region1: #{embeddings_forward.1} parent=0
    #allocation4 [shape = 'u8[8192]{0}', space=vmem, size = 0x2000, scoped, tag = 'output window, operand 0, single buffered']
    #allocation5 [shape = 's32[1]{0}', space=sflag, size = 0x4, scoped, tag = 'scoped memory for embeddings_forward.1']
    %13 = vsyncpa [#allocation5], 0
    // Predicated region
    $region2: #{embeddings_forward.1} parent=1 // pred_check
      _
    $region3: #{embeddings_forward.1} parent=1 // pred_check_branch
      %15 = sbr.rel (0) target = $region5
    $region4: #{embeddings_forward.1} parent=1 // pred_region
      _
    $region5: #{embeddings_forward.1} parent=1 // pred_fallthru
      _
    %s16 = smul.u32 0, 16
    loop: start=0, step=1, limit=2
    $region6: #{embeddings_forward.1} parent=1 // loop_pre_header
      _
    $region7: #{embeddings_forward.1} parent=1 // loop_header
      %s18 = sphi 0, %s22
      %p19 = scmp.ge.s32.totalorder %s18, 2
    $region8: #{embeddings_forward.1} parent=1 // loop_header_branch
      %21 = sbr.rel (%p19) target = $region12
    $region9: #{embeddings_forward.1} parent=1 // loop_body
      %s23 = smul.u32 %s18, 8
      %s24 = sadd.s32 %s16, %s23
      %s25 = sld [smem:[#allocation3 + %s24]]
      %s26 = scalar_lea.vmem %s1, %s25
      %v27 = vld [vmem:[%s26] sm:$0x1]
      %v28 = vmul.f32 %v27, 5.656854
      %s29 = scalar_lea.vmem [#allocation4], %s23
      %vm30 = vcmask 253952
      %31 = vst.msk [vmem:[%s29] sm:$0x1] %vm30, %v28
      %s32 = sadd.s32 %s23, 1
      %s33 = sadd.s32 %s16, %s32
      %s34 = sld [smem:[#allocation3 + %s33]]
      %s35 = scalar_lea.vmem %s1, %s34
      %v36 = vld [vmem:[%s35] sm:$0x1]
      %v37 = vmul.f32 %v36, 5.656854
      %s38 = scalar_lea.vmem [#allocation4], %s32
      %39 = vst.msk [vmem:[%s38] sm:$0x1] %vm30, %v37
      %s40 = sadd.s32 %s23, 2
      %s41 = sadd.s32 %s16, %s40
      %s42 = sld [smem:[#allocation3 + %s41]]
      %s43 = scalar_lea.vmem %s1, %s42
      %v44 = vld [vmem:[%s43] sm:$0x1]
      %v45 = vmul.f32 %v44, 5.656854
      %s46 = scalar_lea.vmem [#allocation4], %s40
      %47 = vst.msk [vmem:[%s46] sm:$0x1] %vm30, %v45
      %s48 = sadd.s32 %s23, 3
      %s49 = sadd.s32 %s16, %s48
      %s50 = sld [smem:[#allocation3 + %s49]]
      %s51 = scalar_lea.vmem %s1, %s50
      %v52 = vld [vmem:[%s51] sm:$0x1]
      %v53 = vmul.f32 %v52, 5.656854
      %s54 = scalar_lea.vmem [#allocation4], %s48
      %55 = vst.msk [vmem:[%s54] sm:$0x1] %vm30, %v53
      %s56 = sadd.s32 %s23, 4
      %s57 = sadd.s32 %s16, %s56
      %s58 = sld [smem:[#allocation3 + %s57]]
      %s59 = scalar_lea.vmem %s1, %s58
      %v60 = vld [vmem:[%s59] sm:$0x1]
      %v61 = vmul.f32 %v60, 5.656854
      %s62 = scalar_lea.vmem [#allocation4], %s56
      %63 = vst.msk [vmem:[%s62] sm:$0x1] %vm30, %v61
      %s64 = sadd.s32 %s23, 5
      %s65 = sadd.s32 %s16, %s64
      %s66 = sld [smem:[#allocation3 + %s65]]
      %s67 = scalar_lea.vmem %s1, %s66
      %v68 = vld [vmem:[%s67] sm:$0x1]
      %v69 = vmul.f32 %v68, 5.656854
      %s70 = scalar_lea.vmem [#allocation4], %s64
      %71 = vst.msk [vmem:[%s70] sm:$0x1] %vm30, %v69
      %s72 = sadd.s32 %s23, 6
      %s73 = sadd.s32 %s16, %s72
      %s74 = sld [smem:[#allocation3 + %s73]]
      %s75 = scalar_lea.vmem %s1, %s74
      %v76 = vld [vmem:[%s75] sm:$0x1]
      %v77 = vmul.f32 %v76, 5.656854
      %s78 = scalar_lea.vmem [#allocation4], %s72
      %79 = vst.msk [vmem:[%s78] sm:$0x1] %vm30, %v77
      %s80 = sadd.s32 %s23, 7
      %s81 = sadd.s32 %s16, %s80
      %s82 = sld [smem:[#allocation3 + %s81]]
      %s83 = scalar_lea.vmem %s1, %s82
      %v84 = vld [vmem:[%s83] sm:$0x1]
      %v85 = vmul.f32 %v84, 5.656854
      %s86 = scalar_lea.vmem [#allocation4], %s80
      %87 = vst.msk [vmem:[%s86] sm:$0x1] %vm30, %v85
    $region10: #{embeddings_forward.1} parent=1 // loop_footer
      %s22 = sadd.s32 1, %s18
    $region11: #{embeddings_forward.1} parent=1 // loop_footer_branch
      %17 = sbr.rel target = $region7
    $region12: #{embeddings_forward.1} parent=1 // loop_exit
      _
    // Predicated region
    $region13: #{embeddings_forward.1} parent=1 // pred_check
      _
    $region14: #{embeddings_forward.1} parent=1 // pred_check_branch
      %89 = sbr.rel (0) target = $region16
    $region15: #{embeddings_forward.1} parent=1 // pred_region
      %s91 = ssub.s32 256, 256
      %92 = vsyncadd [#allocation5], %s91
      %s93 = sshll.u32 [#allocation4], 4
      %s94 = int_to_ptr.vmem [resolvable:$true] %s93
      %99 = dma.vmem_to_hbm [thread:$0]  %s94, 256, %s2, [#allocation5], 128, 128, 8
    $region16: #{embeddings_forward.1} parent=1 // pred_fallthru
      _
    // Predicated region
    $region17: #{embeddings_forward.1} parent=1 // pred_check
      _
    $region18: #{embeddings_forward.1} parent=1 // pred_check_branch
      %101 = sbr.rel (0) target = $region20
    $region19: #{embeddings_forward.1} parent=1 // pred_region
      %102 = dma.done [#allocation5], 256
    $region20: #{embeddings_forward.1} parent=1 // pred_fallthru
      _
    %103 = vsyncpa [#allocation5], 1

</llo_original>
